<compile_context>
chip_gen: v7x
topology: tpu7x:2x2x1
jax: 0.10.0
libtpu: 0.0.40
codegen_flags: <defaults>
</compile_context>

<pallas_src>
import jax
import jax.numpy as jnp
from jax.experimental import pallas as pl
from jax.experimental.pallas import tpu as pltpu


def _round_up(v, m):
    return (v + m - 1) // m * m


def _fc_mean_kernel(x_ref, w_ref, b_ref, mean_ref):
    # x_ref: (tile_b, D) f32, w_ref: (D, A) f32, b_ref: (1, A) f32 -> mean_ref: (tile_b, A) f32
    acc = jnp.dot(x_ref[...], w_ref[...], preferred_element_type=jnp.float32)  # MXU
    mean_ref[...] = acc + b_ref[...]


def _vmem_budget_bytes():
    """Generation-aware VMEM budget: ~64 MiB on v5e/v6e (128 MiB), ~48 MiB on v7x (64 MiB)."""
    try:
        cap = int(pltpu.get_tpu_info().vmem_capacity_bytes)
    except Exception:
        cap = 128 << 20
    return min(cap * 3 // 4, 64 << 20)


def _pick_tile_b(B, D, A, vmem_budget_bytes):
    """Largest multiple-of-8 batch tile whose footprint fits the budget."""
    per_row = 2 * (D * 4) + 2 * (A * 4)      # double-buffered f32 x tile + f32 out tile
    resident = D * A * 4 + A * 4             # weights + bias, single-buffered (Buffered(1))
    avail = max(vmem_budget_bytes - resident, 1 << 20)
    tile = (avail // per_row) // 8 * 8
    tile = max(8, min(8192, tile))
    tile = min(tile, _round_up(B, 8))
    # Give v7x's second TensorCore work when the batch is large enough (no-op on 1-TC chips).
    if B >= 1024:
        tile = min(tile, _round_up(pl.cdiv(B, 2), 8))
    return tile


def _build_fc_mean_call(B, D, A, tile_b, vmem_limit, single_buffer_resident):
    if single_buffer_resident:
        w_spec = pl.BlockSpec((D, A), lambda i: (0, 0),
                              pipeline_mode=pl.Buffered(buffer_count=1))
        b_spec = pl.BlockSpec((1, A), lambda i: (0, 0),
                              pipeline_mode=pl.Buffered(buffer_count=1))
    else:
        w_spec = pl.BlockSpec((D, A), lambda i: (0, 0))
        b_spec = pl.BlockSpec((1, A), lambda i: (0, 0))

    return pl.pallas_call(
        _fc_mean_kernel,
        out_shape=jax.ShapeDtypeStruct((B, A), jnp.float32),
        grid=(pl.cdiv(B, tile_b),),
        in_specs=[
            pl.BlockSpec((tile_b, D), lambda i: (i, 0)),   # streamed batch tiles
            w_spec,                                        # weights: resident
            b_spec,                                        # bias: resident
        ],
        out_specs=pl.BlockSpec((tile_b, A), lambda i: (i, 0)),
        compiler_params=pltpu.CompilerParams(
            dimension_semantics=("parallel",),             # shard batch across TCs on v7x
            vmem_limit_bytes=vmem_limit,
        ),
        cost_estimate=pl.CostEstimate(
            flops=2 * B * D * A,
            transcendentals=0,
            bytes_accessed=(B * D + D * A + A + B * A) * 4,
        ),
    )


def diag_gaussian_beta_forward(x, weight_t, fc_bias, logstd_bias, *, force_pallas=False):
    """Returns (concentration1, concentration0) of FixedBeta.

    x:           (B, num_inputs) f32
    weight_t:    (num_inputs, num_outputs) f32  (transpose of nn.Linear weight)
    fc_bias:     (num_outputs,) f32
    logstd_bias: (num_outputs,) f32  (the AddBias parameter; zeros at init)

    concentration1: (B, num_outputs) f32
    concentration0: (num_outputs,)  f32  -- x-independent; broadcasts against
                                           concentration1 at the consumer (as in Beta).
    """
    B, D = x.shape
    A = weight_t.shape[1]

    x32 = x.astype(jnp.float32)
    w32 = weight_t.astype(jnp.float32)
    b32 = fc_bias.astype(jnp.float32)[None, :]

    # concentration0 = exp(clamp(logstd_bias, min=1e-6)); tiny and x-independent -> plain JAX.
    concentration0 = jnp.exp(jnp.maximum(logstd_bias.astype(jnp.float32), 1e-6))

    # Small-problem fast path: pallas_call launch/pipeline overhead dwarfs a tiny matmul.
    if (2 * B * D * A) < (1 << 22) and not force_pallas:
        concentration1 = x32 @ w32 + b32
        return concentration1, concentration0

    budget = _vmem_budget_bytes()
    tile_b = _pick_tile_b(B, D, A, budget)

    try:
        concentration1 = _build_fc_mean_call(B, D, A, tile_b, budget, True)(x32, w32, b32)
    except Exception:
        # pipeline_mode=pl.Buffered unsupported on this jax version -> default double buffering.
        concentration1 = _build_fc_mean_call(B, D, A, tile_b, budget, False)(x32, w32, b32)

    return concentration1, concentration0


def init_diag_gaussian_beta_params(key, num_inputs, num_outputs, gain=0.01):
    """Orthogonal fc_mean weight (gain=0.01), zero fc bias, zero logstd bias — matches init_()."""
    a = jax.random.normal(key, (num_outputs, num_inputs), dtype=jnp.float32)
    transposed = num_outputs < num_inputs
    if transposed:
        a = a.T
    q, r = jnp.linalg.qr(a)
    q = q * jnp.sign(jnp.diag(r))[None, :]
    if transposed:
        q = q.T
    weight = gain * q                              # (num_outputs, num_inputs)
    fc_bias = jnp.zeros((num_outputs,), jnp.float32)
    logstd_bias = jnp.zeros((num_outputs,), jnp.float32)
    return weight, fc_bias, logstd_bias


if __name__ == "__main__":
    key = jax.random.PRNGKey(0)
    k_x, k_w = jax.random.split(key)

    B, num_inputs, num_outputs = 8, 32, 16

    x = jax.random.normal(k_x, (B, num_inputs), dtype=jnp.float32)
    weight, fc_bias, logstd_bias = init_diag_gaussian_beta_params(k_w, num_inputs, num_outputs)
    weight_t = weight.T                            # (num_inputs, num_outputs) for x @ W

    # Force the Pallas path at demo sizes (auto-dispatch would pick the XLA fast path here).
    conc1, conc0 = diag_gaussian_beta_forward(x, weight_t, fc_bias, logstd_bias,
                                              force_pallas=True)
    jax.block_until_ready((conc1, conc0))

    # Reference (pure JAX / f32).
    ref_mean = x @ weight.T + fc_bias[None, :]
    ref_conc0 = jnp.exp(jnp.maximum(logstd_bias, 1e-6))

    assert conc1.shape == (B, num_outputs) and conc0.shape == (num_outputs,)
    assert jnp.allclose(conc1, ref_mean, atol=1e-3, rtol=1e-3)
    assert jnp.allclose(conc0, ref_conc0, atol=1e-6)

    # Also exercise the auto-dispatch (small-problem XLA fallback) for parity.
    c1_auto, c0_auto = diag_gaussian_beta_forward(x, weight_t, fc_bias, logstd_bias)
    jax.block_until_ready((c1_auto, c0_auto))
    assert jnp.allclose(c1_auto, ref_mean, atol=1e-3, rtol=1e-3)
    assert jnp.allclose(c0_auto, ref_conc0, atol=1e-6)

    print("KERNEL_OK")
</pallas_src>

<mosaic_0001>
module attributes {stable_mosaic.version = 11 : i64} {
  func.func @_fc_mean_kernel(%arg0: i32, %arg1: memref<8x32xf32, #tpu.memory_space<vmem>>, %arg2: memref<32x16xf32, #tpu.memory_space<vmem>>, %arg3: memref<1x16xf32, #tpu.memory_space<vmem>>, %arg4: memref<8x16xf32, #tpu.memory_space<vmem>>) attributes {dimension_semantics = [#tpu.dimension_semantics<parallel>], iteration_bounds = array<i64: 1>, scalar_prefetch = 0 : i64, scratch_operands = 0 : i64, tpu.core_type = #tpu.core_type<tc>, window_params = [{transform_indices = @transform_0, window_bounds = array<i64: 8, 32>}, {pipeline_mode = #tpu.pipeline_mode<synchronous>, transform_indices = @transform_1, window_bounds = array<i64: 32, 16>}, {pipeline_mode = #tpu.pipeline_mode<synchronous>, transform_indices = @transform_2, window_bounds = array<i64: 1, 16>}, {transform_indices = @transform_3, window_bounds = array<i64: 8, 16>}]} {
    %c0 = arith.constant 0 : index
    %c0_0 = arith.constant 0 : index
    %0 = vector.load %arg1[%c0, %c0_0] : memref<8x32xf32, #tpu.memory_space<vmem>>, vector<8x32xf32>
    %c0_1 = arith.constant 0 : index
    %c0_2 = arith.constant 0 : index
    %1 = vector.load %arg2[%c0_1, %c0_2] : memref<32x16xf32, #tpu.memory_space<vmem>>, vector<32x16xf32>
    %cst = arith.constant dense<0.000000e+00> : vector<8x16xf32>
    %2 = tpu.matmul %0, %1, %cst {dimension_numbers = #tpu.dot_dimension_numbers<[1], [0], [0], [1], [0, 0, 1, 1], [], []>} : vector<8x32xf32>, vector<32x16xf32>, vector<8x16xf32> -> vector<8x16xf32>
    %c0_3 = arith.constant 0 : index
    %c0_4 = arith.constant 0 : index
    %3 = vector.load %arg3[%c0_3, %c0_4] : memref<1x16xf32, #tpu.memory_space<vmem>>, vector<1x16xf32>
    %4 = vector.broadcast %3 : vector<1x16xf32> to vector<8x16xf32>
    %5 = arith.addf %2, %4 : vector<8x16xf32>
    %c0_5 = arith.constant 0 : index
    %c0_6 = arith.constant 0 : index
    %6 = vector.load %arg4[%c0_5, %c0_6] : memref<8x16xf32, #tpu.memory_space<vmem>>, vector<8x16xf32>
    tpu.vector_store %arg4[%c0_5, %c0_6], %5 {strides = array<i32>} : memref<8x16xf32, #tpu.memory_space<vmem>>, vector<8x16xf32>,
    return
  }
  func.func @transform_0(%arg0: i32) -> (i32, i32) {
    %c0_i32 = arith.constant 0 : i32
    %c0_i32_0 = arith.constant 0 : i32
    return %arg0, %c0_i32 : i32, i32
  }
  func.func @transform_1(%arg0: i32) -> (i32, i32) {
    %c0_i32 = arith.constant 0 : i32
    %c0_i32_0 = arith.constant 0 : i32
    %c0_i32_1 = arith.constant 0 : i32
    return %c0_i32, %c0_i32_0 : i32, i32
  }
  func.func @transform_2(%arg0: i32) -> (i32, i32) {
    %c0_i32 = arith.constant 0 : i32
    %c0_i32_0 = arith.constant 0 : i32
    %c0_i32_1 = arith.constant 0 : i32
    return %c0_i32, %c0_i32_0 : i32, i32
  }
  func.func @transform_3(%arg0: i32) -> (i32, i32) {
    %c0_i32 = arith.constant 0 : i32
    %c0_i32_0 = arith.constant 0 : i32
    return %arg0, %c0_i32 : i32, i32
  }
}

module attributes {stable_mosaic.version = 11 : i64} {
  func.func @_fc_mean_kernel(%arg0: i32, %arg1: memref<8x32xf32, #tpu.memory_space<vmem>>, %arg2: memref<32x16xf32, #tpu.memory_space<vmem>>, %arg3: memref<1x16xf32, #tpu.memory_space<vmem>>, %arg4: memref<8x16xf32, #tpu.memory_space<vmem>>) attributes {dimension_semantics = [#tpu.dimension_semantics<parallel>], iteration_bounds = array<i64: 1>, scalar_prefetch = 0 : i64, scratch_operands = 0 : i64, tpu.core_type = #tpu.core_type<tc>, window_params = [{transform_indices = @transform_0, window_bounds = array<i64: 8, 32>}, {pipeline_mode = #tpu.pipeline_mode<synchronous>, transform_indices = @transform_1, window_bounds = array<i64: 32, 16>}, {pipeline_mode = #tpu.pipeline_mode<synchronous>, transform_indices = @transform_2, window_bounds = array<i64: 1, 16>}, {transform_indices = @transform_3, window_bounds = array<i64: 8, 16>}]} {
    %c0 = arith.constant 0 : index
    %c0_0 = arith.constant 0 : index
    %0 = vector.load %arg1[%c0, %c0_0] : memref<8x32xf32, #tpu.memory_space<vmem>>, vector<8x32xf32>
    %c0_1 = arith.constant 0 : index
    %c0_2 = arith.constant 0 : index
    %1 = vector.load %arg2[%c0_1, %c0_2] : memref<32x16xf32, #tpu.memory_space<vmem>>, vector<32x16xf32>
    %cst = arith.constant dense<0.000000e+00> : vector<8x16xf32>
    %2 = tpu.matmul %0, %1, %cst {dimension_numbers = #tpu.dot_dimension_numbers<[1], [0], [0], [1], [0, 0, 1, 1], [], []>} : vector<8x32xf32>, vector<32x16xf32>, vector<8x16xf32> -> vector<8x16xf32>
    %c0_3 = arith.constant 0 : index
    %c0_4 = arith.constant 0 : index
    %3 = vector.load %arg3[%c0_3, %c0_4] : memref<1x16xf32, #tpu.memory_space<vmem>>, vector<1x16xf32>
    %4 = vector.broadcast %3 : vector<1x16xf32> to vector<8x16xf32>
    %5 = arith.addf %2, %4 : vector<8x16xf32>
    %c0_5 = arith.constant 0 : index
    %c0_6 = arith.constant 0 : index
    %6 = vector.load %arg4[%c0_5, %c0_6] : memref<8x16xf32, #tpu.memory_space<vmem>>, vector<8x16xf32>
    tpu.vector_store %arg4[%c0_5, %c0_6], %5 {strides = array<i32>} : memref<8x16xf32, #tpu.memory_space<vmem>>, vector<8x16xf32>,
    return
  }
  func.func @transform_0(%arg0: i32) -> (i32, i32) {
    %c0_i32 = arith.constant 0 : i32
    %c0_i32_0 = arith.constant 0 : i32
    return %arg0, %c0_i32 : i32, i32
  }
  func.func @transform_1(%arg0: i32) -> (i32, i32) {
    %c0_i32 = arith.constant 0 : i32
    %c0_i32_0 = arith.constant 0 : i32
    %c0_i32_1 = arith.constant 0 : i32
    return %c0_i32, %c0_i32_0 : i32, i32
  }
  func.func @transform_2(%arg0: i32) -> (i32, i32) {
    %c0_i32 = arith.constant 0 : i32
    %c0_i32_0 = arith.constant 0 : i32
    %c0_i32_1 = arith.constant 0 : i32
    return %c0_i32, %c0_i32_0 : i32, i32
  }
  func.func @transform_3(%arg0: i32) -> (i32, i32) {
    %c0_i32 = arith.constant 0 : i32
    %c0_i32_0 = arith.constant 0 : i32
    return %arg0, %c0_i32 : i32, i32
  }
}

</mosaic_0001>

<llo_original>
// kernel: tpu_custom_call.1
$region0: #{tpu_custom_call.1}
  #allocation0 [shape = 'u32[]', space=smem, size = 0x4, offset = 0x4, fixed_abs, tag = 'smem constant byte address 0x4 - core index']
  #allocation1 [shape = 'u32[144,128]{1,0:T(1,128)}', space=vmem, size = 0x12000, scoped, tag = 'internal scratch']
  %s0 = inlined_call_operand.hbm [shape: f32[8,32], index: 0, kind: input, shape index: {}]
  %s1 = inlined_call_operand.hbm [shape: f32[32,16], index: 1, kind: input, shape index: {}]
  %s2 = inlined_call_operand.hbm [shape: f32[1,16], index: 2, kind: input, shape index: {}]
  %s3 = inlined_call_operand.hbm [shape: f32[8,16], index: 3, kind: output, shape index: {}]
  %s4 = sld [smem:[#allocation0]]
  $region34: #{tpu_custom_call.1} parent=0
    _
  %s6 = ssub.s32 1, %s4
  %s7 = scalar_select 0, %s6, %s4
  $region1: #{tpu_custom_call.1} parent=0
    #allocation2 [shape = 'u8[4096]{0}', space=vmem, size = 0x1000, scoped, tag = 'input window, operand 0, single buffered']
    #allocation3 [shape = 's32[1]{0}', space=sflag, size = 0x4, scoped, tag = 'scoped memory for tpu_custom_call.1']
    #allocation4 [shape = 's32[1]{0}', space=sflag, size = 0x4, scoped, tag = 'scoped memory for tpu_custom_call.1']
    #allocation5 [shape = 'u8[16384]{0}', space=vmem, size = 0x4000, scoped, tag = 'input window, operand 1, single buffered']
    #allocation6 [shape = 's32[1]{0}', space=sflag, size = 0x4, scoped, tag = 'scoped memory for tpu_custom_call.1']
    #allocation7 [shape = 'u8[512]{0}', space=vmem, size = 0x400, scoped, tag = 'input window, operand 2, single buffered']
    #allocation8 [shape = 'u8[4096]{0}', space=vmem, size = 0x1000, scoped, tag = 'output window, operand 0, single buffered']
    %8 = vsyncpa [#allocation3], 0
    %9 = vsyncpa [#allocation6], 0
    %10 = vsyncpa [#allocation4], 0
    // Predicated region
    $region2: #{tpu_custom_call.1} parent=1 // pred_check
      _
    $region3: #{tpu_custom_call.1} parent=1 // pred_check_branch
      %12 = sbr.rel (0) target = $region5
    $region4: #{tpu_custom_call.1} parent=1 // pred_region
      %s14 = ssub.s32 128, 128
      %15 = vsyncadd [#allocation3], %s14
      %s17 = sshll.u32 [#allocation2], 4
      %s18 = int_to_ptr.vmem [resolvable:$true] %s17
      %20 = dma.hbm_to_vmem [thread:$0]  %s0, 128, %s18, [#allocation3]
    $region5: #{tpu_custom_call.1} parent=1 // pred_fallthru
      _
    // Predicated region
    $region6: #{tpu_custom_call.1} parent=1 // pred_check
      _
    $region7: #{tpu_custom_call.1} parent=1 // pred_check_branch
      %22 = sbr.rel (0) target = $region9
    $region8: #{tpu_custom_call.1} parent=1 // pred_region
      %s24 = ssub.s32 512, 512
      %25 = vsyncadd [#allocation6], %s24
      %s26 = sshll.u32 [#allocation5], 4
      %s27 = int_to_ptr.vmem [resolvable:$true] %s26
      %32 = dma.hbm_to_vmem [thread:$0]  %s1, 512, %s27, [#allocation6], 128, 128, 8
    $region9: #{tpu_custom_call.1} parent=1 // pred_fallthru
      _
    // Predicated region
    $region10: #{tpu_custom_call.1} parent=1 // pred_check
      _
    $region11: #{tpu_custom_call.1} parent=1 // pred_check_branch
      %34 = sbr.rel (0) target = $region13
    $region12: #{tpu_custom_call.1} parent=1 // pred_region
      %s36 = ssub.s32 16, 16
      %37 = vsyncadd [#allocation6], %s36
      %s39 = sshll.u32 [#allocation7], 4
      %s40 = int_to_ptr.vmem [resolvable:$true] %s39
      %42 = dma.hbm_to_vmem [thread:$0]  %s2, 16, %s40, [#allocation6]
    $region13: #{tpu_custom_call.1} parent=1 // pred_fallthru
      _
    // Predicated region
    $region14: #{tpu_custom_call.1} parent=1 // pred_check
      _
    $region15: #{tpu_custom_call.1} parent=1 // pred_check_branch
      %44 = sbr.rel (0) target = $region17
    $region16: #{tpu_custom_call.1} parent=1 // pred_region
      %45 = dma.done [#allocation3], 128
    $region17: #{tpu_custom_call.1} parent=1 // pred_fallthru
      _
    // Predicated region
    $region18: #{tpu_custom_call.1} parent=1 // pred_check
      _
    $region19: #{tpu_custom_call.1} parent=1 // pred_check_branch
      %47 = sbr.rel (0) target = $region21
    $region20: #{tpu_custom_call.1} parent=1 // pred_region
      %48 = dma.done [#allocation6], 512
    $region21: #{tpu_custom_call.1} parent=1 // pred_fallthru
      _
    // Predicated region
    $region22: #{tpu_custom_call.1} parent=1 // pred_check
      _
    $region23: #{tpu_custom_call.1} parent=1 // pred_check_branch
      %50 = sbr.rel (0) target = $region25
    $region24: #{tpu_custom_call.1} parent=1 // pred_region
      %51 = dma.done [#allocation6], 16
    $region25: #{tpu_custom_call.1} parent=1 // pred_fallthru
      _
    %v52 = vld [vmem:[#allocation2] sm:$0xff]
    %v53 = vld [vmem:[#allocation5] sm:$0xff]
    %v54 = vld [vmem:[#allocation5 + $0x8] sm:$0xff]
    %v55 = vld [vmem:[#allocation5 + $0x10] sm:$0xff]
    %v56 = vld [vmem:[#allocation5 + $0x18] sm:$0xff]
    %v57 = vld [vmem:[#allocation7] sm:$0x1]
    %v59 = vlaneseq
    %v60 = vshrl.u32 %v59, 7
    %v61 = vsub.s32 0, %v60
    %v62 = vrot.slane %v57, %v61
    %vm64 = vcmask 261120
    %v66 = vsel %vm64, %v52, 0
    %68 = vmatprep.subr.mxu0 0.0
    %69 = vmatpush1.msra.mxu0 %v53
    %70 = vmatprep.subr.mxu0 0.0
    %71 = vmatpush1.msra.mxu0 %v54
    %72 = vmatprep.subr.mxu0 0.0
    %73 = vmatpush1.msra.mxu0 %v55
    %74 = vmatprep.subr.mxu0 0.0
    %75 = vmatpush1.msra.mxu0 %v56
    %76 = vmatprep.subr.mxu0 0.0
    %77 = vmatpush1.msra.mxu0 0.0
    %78 = vmatprep.subr.mxu0 0.0
    %79 = vmatpush1.msra.mxu0 0.0
    %80 = vmatprep.subr.mxu0 0.0
    %81 = vmatpush1.msra.mxu0 0.0
    %82 = vmatprep.subr.mxu0 0.0
    %83 = vmatpush1.msra.mxu0 0.0
    %84 = vmatprep.subr.mxu0 0.0
    %85 = vmatpush1.msra.mxu0 0.0
    %86 = vmatprep.subr.mxu0 0.0
    %87 = vmatpush1.msra.mxu0 0.0
    %88 = vmatprep.subr.mxu0 0.0
    %89 = vmatpush1.msra.mxu0 0.0
    %90 = vmatprep.subr.mxu0 0.0
    %91 = vmatpush1.msra.mxu0 0.0
    %92 = vmatprep.subr.mxu0 0.0
    %93 = vmatpush1.msra.mxu0 0.0
    %94 = vmatprep.subr.mxu0 0.0
    %95 = vmatpush1.msra.mxu0 0.0
    %96 = vmatprep.subr.mxu0 0.0
    %97 = vmatpush1.msra.mxu0 0.0
    %98 = vmatprep.subr.mxu0 0.0
    %99 = vmatpush1.msra.mxu0 0.0
    %100 = vmatprep.subr.mxu0 0.0
    %101 = vmatpush1.msra.mxu0 0.0
    %102 = vmatprep.subr.mxu0 0.0
    %103 = vmatpush1.msra.mxu0 0.0
    %104 = vmatprep.subr.mxu0 0.0
    %105 = vmatpush1.msra.mxu0 0.0
    %106 = vmatprep.subr.mxu0 0.0
    %107 = vmatpush1.msra.mxu0 0.0
    %108 = vmatprep.subr.mxu0 0.0
    %109 = vmatpush1.msra.mxu0 0.0
    %110 = vmatprep.subr.mxu0 0.0
    %111 = vmatpush1.msra.mxu0 0.0
    %112 = vmatprep.subr.mxu0 0.0
    %113 = vmatpush1.msra.mxu0 0.0
    %114 = vmatprep.subr.mxu0 0.0
    %115 = vmatpush1.msra.mxu0 0.0
    %116 = vmatprep.subr.mxu0 0.0
    %117 = vmatpush1.msra.mxu0 0.0
    %118 = vmatprep.subr.mxu0 0.0
    %119 = vmatpush1.msra.mxu0 0.0
    %120 = vmatprep.subr.mxu0 0.0
    %121 = vmatpush1.msra.mxu0 0.0
    %122 = vmatprep.subr.mxu0 0.0
    %123 = vmatpush1.msra.mxu0 0.0
    %124 = vmatprep.subr.mxu0 0.0
    %125 = vmatpush1.msra.mxu0 0.0
    %126 = vmatprep.subr.mxu0 0.0
    %127 = vmatpush1.msra.mxu0 0.0
    %128 = vmatprep.subr.mxu0 0.0
    %129 = vmatpush1.msra.mxu0 0.0
    %130 = vmatprep.subr.mxu0 0.0
    %131 = vmatpush1.msra.mxu0 0.0
    %132 = vmatprep.mubr.f32.mxu0 0.0
    %133 = vmatmul.mubr.f32.gmra.mrb[0].mxu0 %v66
    %v134 = vpop.f32.mrb[0].mxu0
    %v135 = vadd.f32 %v62, %v134
    %v136 = vpop.f32.mrb[0].mxu0
    %137 = vdwg.mxu0
    %vm138 = vcmask 130048
    %139 = vst.msk [vmem:[#allocation8] sm:$0xff] %vm138, %v135
    // Predicated region
    $region26: #{tpu_custom_call.1} parent=1 // pred_check
      _
    $region27: #{tpu_custom_call.1} parent=1 // pred_check_branch
      %141 = sbr.rel (0) target = $region29
    $region28: #{tpu_custom_call.1} parent=1 // pred_region
      %s143 = ssub.s32 128, 128
      %144 = vsyncadd [#allocation4], %s143
      %s146 = sshll.u32 [#allocation8], 4
      %s147 = int_to_ptr.vmem [resolvable:$true] %s146
      %149 = dma.vmem_to_hbm [thread:$0]  %s147, 128, %s3, [#allocation4]
    $region29: #{tpu_custom_call.1} parent=1 // pred_fallthru
      _
    // Predicated region
    $region30: #{tpu_custom_call.1} parent=1 // pred_check
      _
    $region31: #{tpu_custom_call.1} parent=1 // pred_check_branch
      %151 = sbr.rel (0) target = $region33
    $region32: #{tpu_custom_call.1} parent=1 // pred_region
      %152 = dma.done [#allocation4], 128
    $region33: #{tpu_custom_call.1} parent=1 // pred_fallthru
      _
    %153 = vsyncpa [#allocation3], 1
    %154 = vsyncpa [#allocation6], 1
    %155 = vsyncpa [#allocation4], 1

// kernel: tpu_custom_call.1
$region0: #{tpu_custom_call.1}
  #allocation0 [shape = 'u32[]', space=smem, size = 0x4, offset = 0x4, fixed_abs, tag = 'smem constant byte address 0x4 - core index']
  #allocation1 [shape = 'u32[144,128]{1,0:T(1,128)}', space=vmem, size = 0x12000, scoped, tag = 'internal scratch']
  %s0 = inlined_call_operand.hbm [shape: f32[8,32], index: 0, kind: input, shape index: {}]
  %s1 = inlined_call_operand.hbm [shape: f32[32,16], index: 1, kind: input, shape index: {}]
  %s2 = inlined_call_operand.hbm [shape: f32[1,16], index: 2, kind: input, shape index: {}]
  %s3 = inlined_call_operand.hbm [shape: f32[8,16], index: 3, kind: output, shape index: {}]
  %s4 = sld [smem:[#allocation0]]
  $region34: #{tpu_custom_call.1} parent=0
    _
  %s6 = ssub.s32 1, %s4
  %s7 = scalar_select 0, %s6, %s4
  $region1: #{tpu_custom_call.1} parent=0
    #allocation2 [shape = 'u8[4096]{0}', space=vmem, size = 0x1000, scoped, tag = 'input window, operand 0, single buffered']
    #allocation3 [shape = 's32[1]{0}', space=sflag, size = 0x4, scoped, tag = 'scoped memory for tpu_custom_call.1']
    #allocation4 [shape = 's32[1]{0}', space=sflag, size = 0x4, scoped, tag = 'scoped memory for tpu_custom_call.1']
    #allocation5 [shape = 'u8[16384]{0}', space=vmem, size = 0x4000, scoped, tag = 'input window, operand 1, single buffered']
    #allocation6 [shape = 's32[1]{0}', space=sflag, size = 0x4, scoped, tag = 'scoped memory for tpu_custom_call.1']
    #allocation7 [shape = 'u8[512]{0}', space=vmem, size = 0x400, scoped, tag = 'input window, operand 2, single buffered']
    #allocation8 [shape = 'u8[4096]{0}', space=vmem, size = 0x1000, scoped, tag = 'output window, operand 0, single buffered']
    %8 = vsyncpa [#allocation3], 0
    %9 = vsyncpa [#allocation6], 0
    %10 = vsyncpa [#allocation4], 0
    // Predicated region
    $region2: #{tpu_custom_call.1} parent=1 // pred_check
      _
    $region3: #{tpu_custom_call.1} parent=1 // pred_check_branch
      %12 = sbr.rel (0) target = $region5
    $region4: #{tpu_custom_call.1} parent=1 // pred_region
      %s14 = ssub.s32 128, 128
      %15 = vsyncadd [#allocation3], %s14
      %s17 = sshll.u32 [#allocation2], 4
      %s18 = int_to_ptr.vmem [resolvable:$true] %s17
      %20 = dma.hbm_to_vmem [thread:$0]  %s0, 128, %s18, [#allocation3]
    $region5: #{tpu_custom_call.1} parent=1 // pred_fallthru
      _
    // Predicated region
    $region6: #{tpu_custom_call.1} parent=1 // pred_check
      _
    $region7: #{tpu_custom_call.1} parent=1 // pred_check_branch
      %22 = sbr.rel (0) target = $region9
    $region8: #{tpu_custom_call.1} parent=1 // pred_region
      %s24 = ssub.s32 512, 512
      %25 = vsyncadd [#allocation6], %s24
      %s26 = sshll.u32 [#allocation5], 4
      %s27 = int_to_ptr.vmem [resolvable:$true] %s26
      %32 = dma.hbm_to_vmem [thread:$0]  %s1, 512, %s27, [#allocation6], 128, 128, 8
    $region9: #{tpu_custom_call.1} parent=1 // pred_fallthru
      _
    // Predicated region
    $region10: #{tpu_custom_call.1} parent=1 // pred_check
      _
    $region11: #{tpu_custom_call.1} parent=1 // pred_check_branch
      %34 = sbr.rel (0) target = $region13
    $region12: #{tpu_custom_call.1} parent=1 // pred_region
      %s36 = ssub.s32 16, 16
      %37 = vsyncadd [#allocation6], %s36
      %s39 = sshll.u32 [#allocation7], 4
      %s40 = int_to_ptr.vmem [resolvable:$true] %s39
      %42 = dma.hbm_to_vmem [thread:$0]  %s2, 16, %s40, [#allocation6]
    $region13: #{tpu_custom_call.1} parent=1 // pred_fallthru
      _
    // Predicated region
    $region14: #{tpu_custom_call.1} parent=1 // pred_check
      _
    $region15: #{tpu_custom_call.1} parent=1 // pred_check_branch
      %44 = sbr.rel (0) target = $region17
    $region16: #{tpu_custom_call.1} parent=1 // pred_region
      %45 = dma.done [#allocation3], 128
    $region17: #{tpu_custom_call.1} parent=1 // pred_fallthru
      _
    // Predicated region
    $region18: #{tpu_custom_call.1} parent=1 // pred_check
      _
    $region19: #{tpu_custom_call.1} parent=1 // pred_check_branch
      %47 = sbr.rel (0) target = $region21
    $region20: #{tpu_custom_call.1} parent=1 // pred_region
      %48 = dma.done [#allocation6], 512
    $region21: #{tpu_custom_call.1} parent=1 // pred_fallthru
      _
    // Predicated region
    $region22: #{tpu_custom_call.1} parent=1 // pred_check
      _
    $region23: #{tpu_custom_call.1} parent=1 // pred_check_branch
      %50 = sbr.rel (0) target = $region25
    $region24: #{tpu_custom_call.1} parent=1 // pred_region
      %51 = dma.done [#allocation6], 16
    $region25: #{tpu_custom_call.1} parent=1 // pred_fallthru
      _
    %v52 = vld [vmem:[#allocation2] sm:$0xff]
    %v53 = vld [vmem:[#allocation5] sm:$0xff]
    %v54 = vld [vmem:[#allocation5 + $0x8] sm:$0xff]
    %v55 = vld [vmem:[#allocation5 + $0x10] sm:$0xff]
    %v56 = vld [vmem:[#allocation5 + $0x18] sm:$0xff]
    %v57 = vld [vmem:[#allocation7] sm:$0x1]
    %v59 = vlaneseq
    %v60 = vshrl.u32 %v59, 7
    %v61 = vsub.s32 0, %v60
    %v62 = vrot.slane %v57, %v61
    %vm64 = vcmask 261120
    %v66 = vsel %vm64, %v52, 0
    %68 = vmatprep.subr.mxu0 0.0
    %69 = vmatpush1.msra.mxu0 %v53
    %70 = vmatprep.subr.mxu0 0.0
    %71 = vmatpush1.msra.mxu0 %v54
    %72 = vmatprep.subr.mxu0 0.0
    %73 = vmatpush1.msra.mxu0 %v55
    %74 = vmatprep.subr.mxu0 0.0
    %75 = vmatpush1.msra.mxu0 %v56
    %76 = vmatprep.subr.mxu0 0.0
    %77 = vmatpush1.msra.mxu0 0.0
    %78 = vmatprep.subr.mxu0 0.0
    %79 = vmatpush1.msra.mxu0 0.0
    %80 = vmatprep.subr.mxu0 0.0
    %81 = vmatpush1.msra.mxu0 0.0
    %82 = vmatprep.subr.mxu0 0.0
    %83 = vmatpush1.msra.mxu0 0.0
    %84 = vmatprep.subr.mxu0 0.0
    %85 = vmatpush1.msra.mxu0 0.0
    %86 = vmatprep.subr.mxu0 0.0
    %87 = vmatpush1.msra.mxu0 0.0
    %88 = vmatprep.subr.mxu0 0.0
    %89 = vmatpush1.msra.mxu0 0.0
    %90 = vmatprep.subr.mxu0 0.0
    %91 = vmatpush1.msra.mxu0 0.0
    %92 = vmatprep.subr.mxu0 0.0
    %93 = vmatpush1.msra.mxu0 0.0
    %94 = vmatprep.subr.mxu0 0.0
    %95 = vmatpush1.msra.mxu0 0.0
    %96 = vmatprep.subr.mxu0 0.0
    %97 = vmatpush1.msra.mxu0 0.0
    %98 = vmatprep.subr.mxu0 0.0
    %99 = vmatpush1.msra.mxu0 0.0
    %100 = vmatprep.subr.mxu0 0.0
    %101 = vmatpush1.msra.mxu0 0.0
    %102 = vmatprep.subr.mxu0 0.0
    %103 = vmatpush1.msra.mxu0 0.0
    %104 = vmatprep.subr.mxu0 0.0
    %105 = vmatpush1.msra.mxu0 0.0
    %106 = vmatprep.subr.mxu0 0.0
    %107 = vmatpush1.msra.mxu0 0.0
    %108 = vmatprep.subr.mxu0 0.0
    %109 = vmatpush1.msra.mxu0 0.0
    %110 = vmatprep.subr.mxu0 0.0
    %111 = vmatpush1.msra.mxu0 0.0
    %112 = vmatprep.subr.mxu0 0.0
    %113 = vmatpush1.msra.mxu0 0.0
    %114 = vmatprep.subr.mxu0 0.0
    %115 = vmatpush1.msra.mxu0 0.0
    %116 = vmatprep.subr.mxu0 0.0
    %117 = vmatpush1.msra.mxu0 0.0
    %118 = vmatprep.subr.mxu0 0.0
    %119 = vmatpush1.msra.mxu0 0.0
    %120 = vmatprep.subr.mxu0 0.0
    %121 = vmatpush1.msra.mxu0 0.0
    %122 = vmatprep.subr.mxu0 0.0
    %123 = vmatpush1.msra.mxu0 0.0
    %124 = vmatprep.subr.mxu0 0.0
    %125 = vmatpush1.msra.mxu0 0.0
    %126 = vmatprep.subr.mxu0 0.0
    %127 = vmatpush1.msra.mxu0 0.0
    %128 = vmatprep.subr.mxu0 0.0
    %129 = vmatpush1.msra.mxu0 0.0
    %130 = vmatprep.subr.mxu0 0.0
    %131 = vmatpush1.msra.mxu0 0.0
    %132 = vmatprep.mubr.f32.mxu0 0.0
    %133 = vmatmul.mubr.f32.gmra.mrb[0].mxu0 %v66
    %v134 = vpop.f32.mrb[0].mxu0
    %v135 = vadd.f32 %v62, %v134
    %v136 = vpop.f32.mrb[0].mxu0
    %137 = vdwg.mxu0
    %vm138 = vcmask 130048
    %139 = vst.msk [vmem:[#allocation8] sm:$0xff] %vm138, %v135
    // Predicated region
    $region26: #{tpu_custom_call.1} parent=1 // pred_check
      _
    $region27: #{tpu_custom_call.1} parent=1 // pred_check_branch
      %141 = sbr.rel (0) target = $region29
    $region28: #{tpu_custom_call.1} parent=1 // pred_region
      %s143 = ssub.s32 128, 128
      %144 = vsyncadd [#allocation4], %s143
      %s146 = sshll.u32 [#allocation8], 4
      %s147 = int_to_ptr.vmem [resolvable:$true] %s146
      %149 = dma.vmem_to_hbm [thread:$0]  %s147, 128, %s3, [#allocation4]
    $region29: #{tpu_custom_call.1} parent=1 // pred_fallthru
      _
    // Predicated region
    $region30: #{tpu_custom_call.1} parent=1 // pred_check
      _
    $region31: #{tpu_custom_call.1} parent=1 // pred_check_branch
      %151 = sbr.rel (0) target = $region33
    $region32: #{tpu_custom_call.1} parent=1 // pred_region
      %152 = dma.done [#allocation4], 128
    $region33: #{tpu_custom_call.1} parent=1 // pred_fallthru
      _
    %153 = vsyncpa [#allocation3], 1
    %154 = vsyncpa [#allocation6], 1
    %155 = vsyncpa [#allocation4], 1

</llo_original>
